<compile_context>
chip_gen: v6e
topology: v6e:2x2x1
jax: 0.10.0
libtpu: 0.0.40
codegen_flags: <defaults>
</compile_context>

<pallas_src>
import functools

import jax
import jax.numpy as jnp
from jax.experimental import pallas as pl
from jax.experimental.pallas import tpu as pltpu

T_FEAT = 4 * 4        # 16  transform features
V_FEAT = 3            # velocity features
F_FEAT = 4 * 2        # 8   footprint features
IN_FEAT = T_FEAT + V_FEAT + F_FEAT   # 27
NUM_TYPES = 8
LN_EPS = 1e-5

# Per-row HBM bytes on the input side: f32 features + f32 mask + int32 type.
_IN_ROW_BYTES = (IN_FEAT + 1) * 4 + 4          # 116 B/row

_TARGET_STEP_BYTES = 2 * 1024 * 1024           # ~2 MB HBM traffic per grid step
_TILE_VMEM_BUDGET = 20 * 1024 * 1024           # tile buffers (excl. weights), v7x-safe


def _round_up(x, m):
    return (x + m - 1) // m * m


def _pick_tm(M, dim, out_itemsize):
    """Row-tile size: big enough to amortize step overhead, small enough for VMEM,
    and never so big that a large input gets fewer than ~4 grid steps."""
    hbm_row = _IN_ROW_BYTES + dim * out_itemsize
    # double-buffered in/out streams + ~3 f32 (tm, dim) intermediates
    vmem_row = 2 * _IN_ROW_BYTES + 2 * dim * out_itemsize + 3 * dim * 4
    tm = min(_TARGET_STEP_BYTES // hbm_row,
             _TILE_VMEM_BUDGET // vmem_row,
             4096)
    # >= 4 grid steps for large M: 2 pipelined steps per v7x TensorCore.
    tm = min(tm, max(8, _round_up(pl.cdiv(M, 4), 8)))
    # Never bigger than the (row-padded) problem itself.
    tm = min(tm, _round_up(max(M, 1), 8))
    return max(8, (tm // 8) * 8)


def agent_encoder_kernel(t_ref, v_ref, f_ref, m_ref, c_ref,
                         w1t_ref, w1v_ref, w1f_ref, b1_ref, g_ref, beta_ref,
                         w2_ref, b2_ref, emb_ref, o_ref, *, compute_dtype):
    cd = compute_dtype

    # ---- Linear(27 -> dim): three K-split matmuls, f32 accumulation. -------
    # (K = 16 / 3 / 8 is tiny; keeping these in f32 costs nothing on a
    #  mem-bound kernel and keeps the LayerNorm input exact.)
    h = jnp.dot(t_ref[...], w1t_ref[...], preferred_element_type=jnp.float32)
    h = h + jnp.dot(v_ref[...], w1v_ref[...], preferred_element_type=jnp.float32)
    h = h + jnp.dot(f_ref[...], w1f_ref[...], preferred_element_type=jnp.float32)
    h = h + b1_ref[...]

    # ---- LayerNorm (single-pass variance), f32 statistics. -----------------
    mean = jnp.mean(h, axis=-1, keepdims=True)
    msq = jnp.mean(h * h, axis=-1, keepdims=True)
    var = msq - mean * mean
    h = (h - mean) * jax.lax.rsqrt(var + LN_EPS)
    h = h * g_ref[...] + beta_ref[...]

    # ---- ReLU ----------------------------------------------------------------
    h = jnp.maximum(h, 0.0)

    # ---- Linear(dim -> dim): W2 already in compute_dtype (no per-step cast). --
    y = jnp.dot(h.astype(cd), w2_ref[...],
                preferred_element_type=jnp.float32) + b2_ref[...]

    # ---- In-kernel type-embedding gather: one_hot(type, 8) @ type_emb. -------
    # (Exact f32 selection; out-of-range indices yield a zero embedding instead
    #  of the torch gather error -- benign for valid inputs.)
    rows = y.shape[0]
    onehot = (c_ref[...] == jax.lax.broadcasted_iota(
        jnp.int32, (rows, NUM_TYPES), 1)).astype(jnp.float32)        # (tm, 8)
    t_emb = jnp.dot(onehot, emb_ref[...], preferred_element_type=jnp.float32)

    # ---- mask then + type embedding (torch order). ---------------------------
    o_ref[...] = (y * m_ref[...] + t_emb).astype(o_ref.dtype)


def agent_encoder_forward(t, v, f, m, c, params, *, tm=None,
                          compute_dtype=jnp.bfloat16, out_dtype=jnp.float32):
    """Raw per-row streams (no packing):
         t: (M, 16) f32, v: (M, 3) f32, f: (M, 8) f32,
         m: (M, 1) f32 mask, c: (M, 1) int32 type index."""
    M = t.shape[0]
    dim = params["w1"].shape[1]
    cd = compute_dtype
    out_itemsize = jnp.dtype(out_dtype).itemsize

    if tm is None:
        tm = _pick_tm(M, dim, out_itemsize)
    grid = (pl.cdiv(M, tm),)   # partial last block handled by Pallas (masked writes)

    # First-layer weight split per stream (tiny, stays f32); W2 pre-cast once.
    w1 = params["w1"]
    w1t = w1[:T_FEAT]
    w1v = w1[T_FEAT:T_FEAT + V_FEAT]
    w1f = w1[T_FEAT + V_FEAT:IN_FEAT]
    w2 = params["w2"].astype(cd)

    row = lambda d: pl.BlockSpec((tm, d), lambda i: (i, 0))
    rep = lambda s: pl.BlockSpec(s, lambda i: (0, 0))

    # VMEM footprint estimate -> scoped limit (instead of a hard-coded value).
    weight_bytes = (IN_FEAT * dim * 4 + dim * dim * jnp.dtype(cd).itemsize
                    + (NUM_TYPES + 4) * dim * 4)
    tile_bytes = (2 * tm * _IN_ROW_BYTES            # double-buffered input streams
                  + 2 * tm * dim * out_itemsize     # double-buffered output
                  + 3 * tm * dim * 4)               # f32 intermediates (h, y, cast)
    vmem_limit = int(min(max(2 * (tile_bytes + weight_bytes), 32 << 20), 48 << 20))

    y = pl.pallas_call(
        functools.partial(agent_encoder_kernel, compute_dtype=cd),
        out_shape=jax.ShapeDtypeStruct((M, dim), out_dtype),
        grid_spec=pltpu.PrefetchScalarGridSpec(
            num_scalar_prefetch=0,
            grid=grid,
            in_specs=[
                row(T_FEAT),                  # transform rows     (tm, 16)
                row(V_FEAT),                  # velocity rows      (tm, 3)
                row(F_FEAT),                  # footprint rows     (tm, 8)
                row(1),                       # valid mask         (tm, 1) f32
                row(1),                       # type index         (tm, 1) int32
                rep((T_FEAT, dim)),           # W1[:16]   f32
                rep((V_FEAT, dim)),           # W1[16:19] f32
                rep((F_FEAT, dim)),           # W1[19:27] f32
                rep((1, dim)),                # b1
                rep((1, dim)),                # LN gamma
                rep((1, dim)),                # LN beta
                rep((dim, dim)),              # W2 (compute_dtype)
                rep((1, dim)),                # b2
                rep((NUM_TYPES, dim)),        # type embedding table
            ],
            out_specs=pl.BlockSpec((tm, dim), lambda i: (i, 0)),
        ),
        compiler_params=pltpu.CompilerParams(
            dimension_semantics=("parallel",),
            vmem_limit_bytes=vmem_limit,
        ),
        # TODO(synk): if DMA is still exposed after retiling on a profile, add
        # pipeline_mode=pl.Buffered(3) on the streaming row/out specs.
    )(t, v, f, m, c, w1t, w1v, w1f, params["b1"], params["ln_g"], params["ln_b"],
      w2, params["b2"], params["type_emb"])

    return y


def agent_encoder(data, params, *, compute_dtype=jnp.bfloat16,
                  out_dtype=jnp.float32):
    """Wrapper: only free contiguous reshapes here -- no concat / pack pass."""
    pos = data["objects_transform"]       # (B, N, 4, 4)
    cat = data["objects_types"]           # (B, N) int32
    vel = data["objects_velocity"]        # (B, N, 3)
    shp = data["objects_footprint"]       # (B, N, 4, 2)
    mask = data["objects_mask"]           # (B, N)

    B, N = mask.shape
    M = B * N
    dim = params["w1"].shape[1]

    t = pos.reshape(M, T_FEAT).astype(jnp.float32)
    v = vel.reshape(M, V_FEAT).astype(jnp.float32)
    f = shp.reshape(M, F_FEAT).astype(jnp.float32)
    m = mask.reshape(M, 1).astype(jnp.float32)
    c = cat.reshape(M, 1).astype(jnp.int32)

    y = agent_encoder_forward(t, v, f, m, c, params,
                              compute_dtype=compute_dtype, out_dtype=out_dtype)
    return y.reshape(B, N, dim)


def make_params(key, dim):
    ks = jax.random.split(key, 5)
    scale1 = 1.0 / jnp.sqrt(IN_FEAT)
    scale2 = 1.0 / jnp.sqrt(dim)
    return {
        "w1": jax.random.uniform(ks[0], (IN_FEAT, dim), jnp.float32, -scale1, scale1),
        "b1": jax.random.uniform(ks[1], (1, dim), jnp.float32, -scale1, scale1),
        "ln_g": jnp.ones((1, dim), jnp.float32),
        "ln_b": jnp.zeros((1, dim), jnp.float32),
        "w2": jax.random.uniform(ks[2], (dim, dim), jnp.float32, -scale2, scale2),
        "b2": jax.random.uniform(ks[3], (1, dim), jnp.float32, -scale2, scale2),
        "type_emb": jax.random.normal(ks[4], (NUM_TYPES, dim), jnp.float32),
    }


def agent_encoder_ref(data, params):
    """Pure-JAX f32 reference for validation."""
    pos = data["objects_transform"]; cat = data["objects_types"]
    vel = data["objects_velocity"]; shp = data["objects_footprint"]
    mask = data["objects_mask"]
    B, N = mask.shape
    x = jnp.concatenate([pos.reshape(B, N, -1), vel, shp.reshape(B, N, -1)], -1)
    h = x @ params["w1"] + params["b1"][0]
    mu = h.mean(-1, keepdims=True); var = ((h - mu) ** 2).mean(-1, keepdims=True)
    h = (h - mu) / jnp.sqrt(var + LN_EPS) * params["ln_g"][0] + params["ln_b"][0]
    h = jnp.maximum(h, 0.0)
    y = h @ params["w2"] + params["b2"][0]
    y = y * mask[..., None] + params["type_emb"][cat]
    return y


# TODO(synk): use_ego_history=True branch (history_embedding MLP + dropout) not
# implemented; module default is use_ego_history=False so forward never hits it.

if __name__ == "__main__":
    key = jax.random.PRNGKey(0)
    k_param, k_pos, k_vel, k_shp, k_cat, k_msk = jax.random.split(key, 6)

    B, N_obj, dim = 2, 8, 128
    params = make_params(k_param, dim)

    data = {
        "objects_transform": jax.random.normal(k_pos, (B, N_obj, 4, 4), jnp.float32),
        "objects_velocity": jax.random.normal(k_vel, (B, N_obj, 3), jnp.float32),
        "objects_footprint": jax.random.normal(k_shp, (B, N_obj, 4, 2), jnp.float32),
        "objects_types": jax.random.randint(k_cat, (B, N_obj), 0, 8, jnp.int32),
        "objects_mask": (jax.random.uniform(k_msk, (B, N_obj)) > 0.3).astype(jnp.float32),
        # present in the torch forward signature but unused when use_ego_history=False:
        "history_trajectories_transform": jnp.zeros((B, 21, 4, 4), jnp.float32),
        "history_trajectories_speed": jnp.zeros((B, 21, 1), jnp.float32),
    }

    ref = agent_encoder_ref(data, params)

    # 1) f32 compute path: tight check against the f32 reference.
    out_f32 = agent_encoder(data, params, compute_dtype=jnp.float32)
    out_f32 = jax.block_until_ready(out_f32)
    assert out_f32.shape == (B, N_obj, dim)
    assert bool(jnp.allclose(out_f32, ref, atol=1e-4, rtol=1e-4)), "f32 path mismatch"

    # 2) Default path: bf16 second matmul (f32 accumulation), f32 output.
    out_bf16 = agent_encoder(data, params)
    out_bf16 = jax.block_until_ready(out_bf16)
    assert out_bf16.shape == (B, N_obj, dim)
    assert bool(jnp.allclose(out_bf16, ref, atol=1e-1, rtol=1e-1)), "bf16 path mismatch"

    # 3) bf16 output stream (for bf16 consumers): looser check.
    out_b16o = agent_encoder(data, params, out_dtype=jnp.bfloat16)
    out_b16o = jax.block_until_ready(out_b16o)
    assert out_b16o.dtype == jnp.bfloat16
    assert bool(jnp.allclose(out_b16o.astype(jnp.float32), ref, atol=2e-1, rtol=2e-1)), \
        "bf16-out path mismatch"

    print("KERNEL_OK")
</pallas_src>

<mosaic_0001>
module attributes {stable_mosaic.version = 11 : i64} {
  func.func @agent_encoder_kernel(%arg0: i32, %arg1: memref<8x16xf32, #tpu.memory_space<vmem>>, %arg2: memref<8x3xf32, #tpu.memory_space<vmem>>, %arg3: memref<8x8xf32, #tpu.memory_space<vmem>>, %arg4: memref<8x1xf32, #tpu.memory_space<vmem>>, %arg5: memref<8x1xi32, #tpu.memory_space<vmem>>, %arg6: memref<16x128xf32, #tpu.memory_space<vmem>>, %arg7: memref<3x128xf32, #tpu.memory_space<vmem>>, %arg8: memref<8x128xf32, #tpu.memory_space<vmem>>, %arg9: memref<1x128xf32, #tpu.memory_space<vmem>>, %arg10: memref<1x128xf32, #tpu.memory_space<vmem>>, %arg11: memref<1x128xf32, #tpu.memory_space<vmem>>, %arg12: memref<128x128xf32, #tpu.memory_space<vmem>>, %arg13: memref<1x128xf32, #tpu.memory_space<vmem>>, %arg14: memref<8x128xf32, #tpu.memory_space<vmem>>, %arg15: memref<8x128xf32, #tpu.memory_space<vmem>>) attributes {dimension_semantics = [#tpu.dimension_semantics<parallel>], iteration_bounds = array<i64: 2>, scalar_prefetch = 0 : i64, scratch_operands = 0 : i64, tpu.core_type = #tpu.core_type<tc>, window_params = [{transform_indices = @transform_0, window_bounds = array<i64: 8, 16>}, {transform_indices = @transform_1, window_bounds = array<i64: 8, 3>}, {transform_indices = @transform_2, window_bounds = array<i64: 8, 8>}, {transform_indices = @transform_3, window_bounds = array<i64: 8, 1>}, {transform_indices = @transform_4, window_bounds = array<i64: 8, 1>}, {pipeline_mode = #tpu.pipeline_mode<synchronous>, transform_indices = @transform_5, window_bounds = array<i64: 16, 128>}, {pipeline_mode = #tpu.pipeline_mode<synchronous>, transform_indices = @transform_6, window_bounds = array<i64: 3, 128>}, {pipeline_mode = #tpu.pipeline_mode<synchronous>, transform_indices = @transform_7, window_bounds = array<i64: 8, 128>}, {pipeline_mode = #tpu.pipeline_mode<synchronous>, transform_indices = @transform_8, window_bounds = array<i64: 1, 128>}, {pipeline_mode = #tpu.pipeline_mode<synchronous>, transform_indices = @transform_9, window_bounds = array<i64: 1, 128>}, {pipeline_mode = #tpu.pipeline_mode<synchronous>, transform_indices = @transform_10, window_bounds = array<i64: 1, 128>}, {pipeline_mode = #tpu.pipeline_mode<synchronous>, transform_indices = @transform_11, window_bounds = array<i64: 128, 128>}, {pipeline_mode = #tpu.pipeline_mode<synchronous>, transform_indices = @transform_12, window_bounds = array<i64: 1, 128>}, {pipeline_mode = #tpu.pipeline_mode<synchronous>, transform_indices = @transform_13, window_bounds = array<i64: 8, 128>}, {transform_indices = @transform_14, window_bounds = array<i64: 8, 128>}]} {
    %c0 = arith.constant 0 : index
    %c0_0 = arith.constant 0 : index
    %0 = vector.load %arg1[%c0, %c0_0] : memref<8x16xf32, #tpu.memory_space<vmem>>, vector<8x16xf32>
    %c0_1 = arith.constant 0 : index
    %c0_2 = arith.constant 0 : index
    %1 = vector.load %arg6[%c0_1, %c0_2] : memref<16x128xf32, #tpu.memory_space<vmem>>, vector<16x128xf32>
    %cst = arith.constant dense<0.000000e+00> : vector<8x128xf32>
    %2 = tpu.matmul %0, %1, %cst {dimension_numbers = #tpu.dot_dimension_numbers<[1], [0], [0], [1], [0, 0, 1, 1], [], []>} : vector<8x16xf32>, vector<16x128xf32>, vector<8x128xf32> -> vector<8x128xf32>
    %c0_3 = arith.constant 0 : index
    %c0_4 = arith.constant 0 : index
    %3 = vector.load %arg2[%c0_3, %c0_4] : memref<8x3xf32, #tpu.memory_space<vmem>>, vector<8x3xf32>
    %c0_5 = arith.constant 0 : index
    %c0_6 = arith.constant 0 : index
    %4 = vector.load %arg7[%c0_5, %c0_6] : memref<3x128xf32, #tpu.memory_space<vmem>>, vector<3x128xf32>
    %cst_7 = arith.constant dense<0.000000e+00> : vector<8x128xf32>
    %5 = tpu.matmul %3, %4, %cst_7 {dimension_numbers = #tpu.dot_dimension_numbers<[1], [0], [0], [1], [0, 0, 1, 1], [], []>} : vector<8x3xf32>, vector<3x128xf32>, vector<8x128xf32> -> vector<8x128xf32>
    %6 = arith.addf %2, %5 : vector<8x128xf32>
    %c0_8 = arith.constant 0 : index
    %c0_9 = arith.constant 0 : index
    %7 = vector.load %arg3[%c0_8, %c0_9] : memref<8x8xf32, #tpu.memory_space<vmem>>, vector<8x8xf32>
    %c0_10 = arith.constant 0 : index
    %c0_11 = arith.constant 0 : index
    %8 = vector.load %arg8[%c0_10, %c0_11] : memref<8x128xf32, #tpu.memory_space<vmem>>, vector<8x128xf32>
    %cst_12 = arith.constant dense<0.000000e+00> : vector<8x128xf32>
    %9 = tpu.matmul %7, %8, %cst_12 {dimension_numbers = #tpu.dot_dimension_numbers<[1], [0], [0], [1], [0, 0, 1, 1], [], []>} : vector<8x8xf32>, vector<8x128xf32>, vector<8x128xf32> -> vector<8x128xf32>
    %10 = arith.addf %6, %9 : vector<8x128xf32>
    %c0_13 = arith.constant 0 : index
    %c0_14 = arith.constant 0 : index
    %11 = vector.load %arg9[%c0_13, %c0_14] : memref<1x128xf32, #tpu.memory_space<vmem>>, vector<1x128xf32>
    %12 = vector.broadcast %11 : vector<1x128xf32> to vector<8x128xf32>
    %13 = arith.addf %10, %12 : vector<8x128xf32>
    %cst_15 = arith.constant dense<0.000000e+00> : vector<8xf32>
    %14 = vector.multi_reduction <add>, %13, %cst_15 [1] : vector<8x128xf32> to vector<8xf32>
    %15 = vector.shape_cast %14 : vector<8xf32> to vector<8x1xf32>
    %cst_16 = arith.constant 1.280000e+02 : f32
    %16 = vector.broadcast %cst_16 : f32 to vector<8x1xf32>
    %17 = arith.divf %15, %16 : vector<8x1xf32>
    %18 = arith.mulf %13, %13 : vector<8x128xf32>
    %cst_17 = arith.constant dense<0.000000e+00> : vector<8xf32>
    %19 = vector.multi_reduction <add>, %18, %cst_17 [1] : vector<8x128xf32> to vector<8xf32>
    %20 = vector.shape_cast %19 : vector<8xf32> to vector<8x1xf32>
    %cst_18 = arith.constant 1.280000e+02 : f32
    %21 = vector.broadcast %cst_18 : f32 to vector<8x1xf32>
    %22 = arith.divf %20, %21 : vector<8x1xf32>
    %23 = arith.mulf %17, %17 : vector<8x1xf32>
    %24 = arith.subf %22, %23 : vector<8x1xf32>
    %25 = vector.broadcast %17 : vector<8x1xf32> to vector<8x128xf32>
    %26 = arith.subf %13, %25 : vector<8x128xf32>
    %cst_19 = arith.constant 9.99999974E-6 : f32
    %27 = vector.broadcast %cst_19 : f32 to vector<8x1xf32>
    %28 = arith.addf %24, %27 : vector<8x1xf32>
    %29 = math.rsqrt %28 : vector<8x1xf32>
    %30 = vector.broadcast %29 : vector<8x1xf32> to vector<8x128xf32>
    %31 = arith.mulf %26, %30 : vector<8x128xf32>
    %c0_20 = arith.constant 0 : index
    %c0_21 = arith.constant 0 : index
    %32 = vector.load %arg10[%c0_20, %c0_21] : memref<1x128xf32, #tpu.memory_space<vmem>>, vector<1x128xf32>
    %33 = vector.broadcast %32 : vector<1x128xf32> to vector<8x128xf32>
    %34 = arith.mulf %31, %33 : vector<8x128xf32>
    %c0_22 = arith.constant 0 : index
    %c0_23 = arith.constant 0 : index
    %35 = vector.load %arg11[%c0_22, %c0_23] : memref<1x128xf32, #tpu.memory_space<vmem>>, vector<1x128xf32>
    %36 = vector.broadcast %35 : vector<1x128xf32> to vector<8x128xf32>
    %37 = arith.addf %34, %36 : vector<8x128xf32>
    %cst_24 = arith.constant 0.000000e+00 : f32
    %38 = vector.broadcast %cst_24 : f32 to vector<8x128xf32>
    %39 = arith.maximumf %37, %38 : vector<8x128xf32>
    %c0_25 = arith.constant 0 : index
    %c0_26 = arith.constant 0 : index
    %40 = vector.load %arg12[%c0_25, %c0_26] : memref<128x128xf32, #tpu.memory_space<vmem>>, vector<128x128xf32>
    %cst_27 = arith.constant dense<0.000000e+00> : vector<8x128xf32>
    %41 = tpu.matmul %39, %40, %cst_27 {dimension_numbers = #tpu.dot_dimension_numbers<[1], [0], [0], [1], [0, 0, 1, 1], [], []>} : vector<8x128xf32>, vector<128x128xf32>, vector<8x128xf32> -> vector<8x128xf32>
    %c0_28 = arith.constant 0 : index
    %c0_29 = arith.constant 0 : index
    %42 = vector.load %arg13[%c0_28, %c0_29] : memref<1x128xf32, #tpu.memory_space<vmem>>, vector<1x128xf32>
    %43 = vector.broadcast %42 : vector<1x128xf32> to vector<8x128xf32>
    %44 = arith.addf %41, %43 : vector<8x128xf32>
    %c0_30 = arith.constant 0 : index
    %c0_31 = arith.constant 0 : index
    %45 = vector.load %arg5[%c0_30, %c0_31] : memref<8x1xi32, #tpu.memory_space<vmem>>, vector<8x1xi32>
    %46 = tpu.iota {dimensions = array<i32: 1>} : vector<8x8xi32>
    %47 = vector.broadcast %45 : vector<8x1xi32> to vector<8x8xi32>
    %48 = arith.cmpi eq, %47, %46 : vector<8x8xi32>
    %49 = arith.extui %48 : vector<8x8xi1> to vector<8x8xi32>
    %50 = arith.sitofp %49 : vector<8x8xi32> to vector<8x8xf32>
    %c0_32 = arith.constant 0 : index
    %c0_33 = arith.constant 0 : index
    %51 = vector.load %arg14[%c0_32, %c0_33] : memref<8x128xf32, #tpu.memory_space<vmem>>, vector<8x128xf32>
    %cst_34 = arith.constant dense<0.000000e+00> : vector<8x128xf32>
    %52 = tpu.matmul %50, %51, %cst_34 {dimension_numbers = #tpu.dot_dimension_numbers<[1], [0], [0], [1], [0, 0, 1, 1], [], []>} : vector<8x8xf32>, vector<8x128xf32>, vector<8x128xf32> -> vector<8x128xf32>
    %c0_35 = arith.constant 0 : index
    %c0_36 = arith.constant 0 : index
    %53 = vector.load %arg4[%c0_35, %c0_36] : memref<8x1xf32, #tpu.memory_space<vmem>>, vector<8x1xf32>
    %54 = vector.broadcast %53 : vector<8x1xf32> to vector<8x128xf32>
    %55 = arith.mulf %44, %54 : vector<8x128xf32>
    %56 = arith.addf %55, %52 : vector<8x128xf32>
    %c0_37 = arith.constant 0 : index
    %c0_38 = arith.constant 0 : index
    %57 = vector.load %arg15[%c0_37, %c0_38] : memref<8x128xf32, #tpu.memory_space<vmem>>, vector<8x128xf32>
    tpu.vector_store %arg15[%c0_37, %c0_38], %56 {strides = array<i32>} : memref<8x128xf32, #tpu.memory_space<vmem>>, vector<8x128xf32>,
    return
  }
  func.func @transform_0(%arg0: i32) -> (i32, i32) {
    %c0_i32 = arith.constant 0 : i32
    %c0_i32_0 = arith.constant 0 : i32
    return %arg0, %c0_i32 : i32, i32
  }
  func.func @transform_1(%arg0: i32) -> (i32, i32) {
    %c0_i32 = arith.constant 0 : i32
    %c0_i32_0 = arith.constant 0 : i32
    return %arg0, %c0_i32 : i32, i32
  }
  func.func @transform_2(%arg0: i32) -> (i32, i32) {
    %c0_i32 = arith.constant 0 : i32
    %c0_i32_0 = arith.constant 0 : i32
    return %arg0, %c0_i32 : i32, i32
  }
  func.func @transform_3(%arg0: i32) -> (i32, i32) {
    %c0_i32 = arith.constant 0 : i32
    %c0_i32_0 = arith.constant 0 : i32
    return %arg0, %c0_i32 : i32, i32
  }
  func.func @transform_4(%arg0: i32) -> (i32, i32) {
    %c0_i32 = arith.constant 0 : i32
    %c0_i32_0 = arith.constant 0 : i32
    return %arg0, %c0_i32 : i32, i32
  }
  func.func @transform_5(%arg0: i32) -> (i32, i32) {
    %c0_i32 = arith.constant 0 : i32
    %c0_i32_0 = arith.constant 0 : i32
    %c0_i32_1 = arith.constant 0 : i32
    return %c0_i32, %c0_i32_0 : i32, i32
  }
  func.func @transform_6(%arg0: i32) -> (i32, i32) {
    %c0_i32 = arith.constant 0 : i32
    %c0_i32_0 = arith.constant 0 : i32
    %c0_i32_1 = arith.constant 0 : i32
    return %c0_i32, %c0_i32_0 : i32, i32
  }
  func.func @transform_7(%arg0: i32) -> (i32, i32) {
    %c0_i32 = arith.constant 0 : i32
    %c0_i32_0 = arith.constant 0 : i32
    %c0_i32_1 = arith.constant 0 : i32
    return %c0_i32, %c0_i32_0 : i32, i32
  }
  func.func @transform_8(%arg0: i32) -> (i32, i32) {
    %c0_i32 = arith.constant 0 : i32
    %c0_i32_0 = arith.constant 0 : i32
    %c0_i32_1 = arith.constant 0 : i32
    return %c0_i32, %c0_i32_0 : i32, i32
  }
  func.func @transform_9(%arg0: i32) -> (i32, i32) {
    %c0_i32 = arith.constant 0 : i32
    %c0_i32_0 = arith.constant 0 : i32
    %c0_i32_1 = arith.constant 0 : i32
    return %c0_i32, %c0_i32_0 : i32, i32
  }
  func.func @transform_10(%arg0: i32) -> (i32, i32) {
    %c0_i32 = arith.constant 0 : i32
    %c0_i32_0 = arith.constant 0 : i32
    %c0_i32_1 = arith.constant 0 : i32
    return %c0_i32, %c0_i32_0 : i32, i32
  }
  func.func @transform_11(%arg0: i32) -> (i32, i32) {
    %c0_i32 = arith.constant 0 : i32
    %c0_i32_0 = arith.constant 0 : i32
    %c0_i32_1 = arith.constant 0 : i32
    return %c0_i32, %c0_i32_0 : i32, i32
  }
  func.func @transform_12(%arg0: i32) -> (i32, i32) {
    %c0_i32 = arith.constant 0 : i32
    %c0_i32_0 = arith.constant 0 : i32
    %c0_i32_1 = arith.constant 0 : i32
    return %c0_i32, %c0_i32_0 : i32, i32
  }
  func.func @transform_13(%arg0: i32) -> (i32, i32) {
    %c0_i32 = arith.constant 0 : i32
    %c0_i32_0 = arith.constant 0 : i32
    %c0_i32_1 = arith.constant 0 : i32
    return %c0_i32, %c0_i32_0 : i32, i32
  }
  func.func @transform_14(%arg0: i32) -> (i32, i32) {
    %c0_i32 = arith.constant 0 : i32
    %c0_i32_0 = arith.constant 0 : i32
    return %arg0, %c0_i32 : i32, i32
  }
}

</mosaic_0001>

<llo_original>
// kernel: tpu_custom_call.1
$region0: #{tpu_custom_call.1}
  #allocation0 [shape = 'u32[]', space=smem, size = 0x4, offset = 0x4, fixed_abs, tag = 'smem constant byte address 0x4 - core index']
  #allocation1 [shape = 'u32[144,128]{1,0:T(1,128)}', space=vmem, size = 0x12000, scoped, tag = 'internal scratch']
  %s0 = inlined_call_operand.vmem [shape: f32[16,16], index: 0, kind: input, shape index: {}]
  %s1 = inlined_call_operand.vmem [shape: f32[16,3], index: 1, kind: input, shape index: {}]
  %s2 = inlined_call_operand.vmem [shape: f32[16,8], index: 2, kind: input, shape index: {}]
  %s3 = inlined_call_operand.vmem [shape: f32[16,1], index: 3, kind: input, shape index: {}]
  %s4 = inlined_call_operand.vmem [shape: s32[16,1], index: 4, kind: input, shape index: {}]
  %s5 = inlined_call_operand.vmem [shape: f32[16,128], index: 5, kind: input, shape index: {}]
  %s6 = inlined_call_operand.vmem [shape: f32[3,128], index: 6, kind: input, shape index: {}]
  %s7 = inlined_call_operand.vmem [shape: f32[8,128], index: 7, kind: input, shape index: {}]
  %s8 = inlined_call_operand.vmem [shape: f32[1,128], index: 8, kind: input, shape index: {}]
  %s9 = inlined_call_operand.vmem [shape: f32[1,128], index: 9, kind: input, shape index: {}]
  %s10 = inlined_call_operand.vmem [shape: f32[1,128], index: 10, kind: input, shape index: {}]
  %s11 = inlined_call_operand.hbm [shape: f32[128,128], index: 11, kind: input, shape index: {}]
  %s12 = inlined_call_operand.vmem [shape: f32[1,128], index: 12, kind: input, shape index: {}]
  %s13 = inlined_call_operand.vmem [shape: f32[8,128], index: 13, kind: input, shape index: {}]
  %s14 = inlined_call_operand.hbm [shape: f32[16,128], index: 14, kind: output, shape index: {}]
  %s15 = sld [smem:[#allocation0]]
  $region93: #{tpu_custom_call.1} parent=0
    _
  %s17 = ssub.s32 1, %s15
  %s18 = scalar_select 0, %s17, %s15
  $region1: #{tpu_custom_call.1} parent=0
    #allocation2 [shape = 'u8[65536]{0}', space=vmem, size = 0x10000, scoped, tag = 'input window, operand 11, single buffered']
    #allocation3 [shape = 's32[2]{0}', space=sflag, size = 0x8, scoped, tag = 'scoped memory for tpu_custom_call.1']
    #allocation4 [shape = 's32[2]{0}', space=sflag, size = 0x8, scoped, tag = 'scoped memory for tpu_custom_call.1']
    #allocation5 [shape = 'u8[8192]{0}', space=vmem, size = 0x2000, scoped, tag = 'output window, operand 0']
    %19 = vsyncpa [#allocation3], 0
    %20 = vsyncpa [#allocation4], 0
    %s21 = scalar_lea.sflag [#allocation4], 1
    %22 = vsyncpa %s21, 0
    loop: start=0, step=1, limit=4
    $region2: #{tpu_custom_call.1} parent=1 // loop_pre_header
      _
    $region3: #{tpu_custom_call.1} parent=1 // loop_header
      %s24 = sphi 0, %s28
      %p25 = scmp.ge.s32.totalorder %s24, 4
      %s34 = sphi 0, %s36
      %s37 = sphi 0, %s34
      %s38 = sphi 0, %s37
      %s54 = sphi 0, %s38
      %s60 = sphi 0, %s62
      %s63 = sphi 0, %s60
      %s64 = sphi 0, %s63
      %s80 = sphi 0, %s64
      %s86 = sphi 0, %s88
      %s89 = sphi 0, %s86
      %s90 = sphi 0, %s89
      %s106 = sphi 0, %s90
      %s112 = sphi 0, %s114
      %s115 = sphi 0, %s112
      %s116 = sphi 0, %s115
      %s132 = sphi 0, %s116
      %s138 = sphi 0, %s140
      %s141 = sphi 0, %s138
      %s142 = sphi 0, %s141
      %s158 = sphi 0, %s142
      %s162 = sphi 0, %s162
      %s164 = sphi 0, %s162
      %s165 = sphi 0, %s164
      %s179 = sphi 0, %s165
      %s183 = sphi 0, %s183
      %s185 = sphi 0, %s183
      %s186 = sphi 0, %s185
      %s200 = sphi 0, %s186
      %s204 = sphi 0, %s204
      %s206 = sphi 0, %s204
      %s207 = sphi 0, %s206
      %s221 = sphi 0, %s207
      %s225 = sphi 0, %s225
      %s227 = sphi 0, %s225
      %s228 = sphi 0, %s227
      %s242 = sphi 0, %s228
      %s246 = sphi 0, %s246
      %s248 = sphi 0, %s246
      %s249 = sphi 0, %s248
      %s263 = sphi 0, %s249
      %s267 = sphi 0, %s267
      %s269 = sphi 0, %s267
      %s270 = sphi 0, %s269
      %s284 = sphi 0, %s270
      %s288 = sphi 0, %s288
      %s290 = sphi 0, %s288
      %s291 = sphi 0, %s290
      %s305 = sphi 0, %s291
      %s309 = sphi 0, %s309
      %s311 = sphi 0, %s309
      %s312 = sphi 0, %s311
      %s326 = sphi 0, %s312
      %s330 = sphi 0, %s330
      %s332 = sphi 0, %s330
      %s333 = sphi 0, %s332
      %s347 = sphi 0, %s333
      %s353 = sphi 0, %s355
      %s356 = sphi 0, %s353
      %s357 = sphi 0, %s356
      %s373 = sphi 0, %s357
    $region4: #{tpu_custom_call.1} parent=1 // loop_header_branch
      %27 = sbr.rel (%p25) target = $region8
    $region5: #{tpu_custom_call.1} parent=1 // loop_body
      %s29 = ssub.s32 %s24, 1
      %s30 = ssub.s32 %s24, 2
      %s31 = sadd.s32 %s24, 1
      %s32 = ssub.s32 %s24, %s31
      %p33 = scmp.eq.s32.totalorder %s32, 0
      %s35 = sadd.s32 %s34, 1
      %s36 = scalar_select %p33, %s34, %s35
      %p39 = pneg %p33
      %p40 = scmp.eq.s32.totalorder %s24, 1
      %p41 = por %p39, %p40
      %p42 = scmp.ne.s32.totalorder %s34, %s37
      %p43 = scmp.eq.s32.totalorder %s24, 0
      %p44 = por %p42, %p43
      %p45 = scmp.ne.s32.totalorder %s34, %s37
      %p46 = scmp.eq.s32.totalorder %s29, 1
      %p47 = por %p45, %p46
      %p48 = scmp.ne.s32.totalorder %s37, %s38
      %p49 = scmp.eq.s32.totalorder %s29, 0
      %p50 = por %p48, %p49
      %p51 = scmp.ne.s32.totalorder %s37, %s38
      %p52 = scmp.eq.s32.totalorder %s30, 1
      %p53 = por %p51, %p52
      %p55 = scmp.ne.s32.totalorder %s38, %s54
      %p56 = scmp.eq.s32.totalorder %s30, 0
      %p57 = por %p55, %p56
      %s58 = ssub.s32 %s24, %s31
      %p59 = scmp.eq.s32.totalorder %s58, 0
      %s61 = sadd.s32 %s60, 1
      %s62 = scalar_select %p59, %s60, %s61
      %p65 = pneg %p59
      %p66 = scmp.eq.s32.totalorder %s24, 1
      %p67 = por %p65, %p66
      %p68 = scmp.ne.s32.totalorder %s60, %s63
      %p69 = scmp.eq.s32.totalorder %s24, 0
      %p70 = por %p68, %p69
      %p71 = scmp.ne.s32.totalorder %s60, %s63
      %p72 = scmp.eq.s32.totalorder %s29, 1
      %p73 = por %p71, %p72
      %p74 = scmp.ne.s32.totalorder %s63, %s64
      %p75 = scmp.eq.s32.totalorder %s29, 0
      %p76 = por %p74, %p75
      %p77 = scmp.ne.s32.totalorder %s63, %s64
      %p78 = scmp.eq.s32.totalorder %s30, 1
      %p79 = por %p77, %p78
      %p81 = scmp.ne.s32.totalorder %s64, %s80
      %p82 = scmp.eq.s32.totalorder %s30, 0
      %p83 = por %p81, %p82
      %s84 = ssub.s32 %s24, %s31
      %p85 = scmp.eq.s32.totalorder %s84, 0
      %s87 = sadd.s32 %s86, 1
      %s88 = scalar_select %p85, %s86, %s87
      %p91 = pneg %p85
      %p92 = scmp.eq.s32.totalorder %s24, 1
      %p93 = por %p91, %p92
      %p94 = scmp.ne.s32.totalorder %s86, %s89
      %p95 = scmp.eq.s32.totalorder %s24, 0
      %p96 = por %p94, %p95
      %p97 = scmp.ne.s32.totalorder %s86, %s89
      %p98 = scmp.eq.s32.totalorder %s29, 1
      %p99 = por %p97, %p98
      %p100 = scmp.ne.s32.totalorder %s89, %s90
      %p101 = scmp.eq.s32.totalorder %s29, 0
      %p102 = por %p100, %p101
      %p103 = scmp.ne.s32.totalorder %s89, %s90
      %p104 = scmp.eq.s32.totalorder %s30, 1
      %p105 = por %p103, %p104
      %p107 = scmp.ne.s32.totalorder %s90, %s106
      %p108 = scmp.eq.s32.totalorder %s30, 0
      %p109 = por %p107, %p108
      %s110 = ssub.s32 %s24, %s31
      %p111 = scmp.eq.s32.totalorder %s110, 0
      %s113 = sadd.s32 %s112, 1
      %s114 = scalar_select %p111, %s112, %s113
      %p117 = pneg %p111
      %p118 = scmp.eq.s32.totalorder %s24, 1
      %p119 = por %p117, %p118
      %p120 = scmp.ne.s32.totalorder %s112, %s115
      %p121 = scmp.eq.s32.totalorder %s24, 0
      %p122 = por %p120, %p121
      %p123 = scmp.ne.s32.totalorder %s112, %s115
      %p124 = scmp.eq.s32.totalorder %s29, 1
      %p125 = por %p123, %p124
      %p126 = scmp.ne.s32.totalorder %s115, %s116
      %p127 = scmp.eq.s32.totalorder %s29, 0
      %p128 = por %p126, %p127
      %p129 = scmp.ne.s32.totalorder %s115, %s116
      %p130 = scmp.eq.s32.totalorder %s30, 1
      %p131 = por %p129, %p130
      %p133 = scmp.ne.s32.totalorder %s116, %s132
      %p134 = scmp.eq.s32.totalorder %s30, 0
      %p135 = por %p133, %p134
      %s136 = ssub.s32 %s24, %s31
      %p137 = scmp.eq.s32.totalorder %s136, 0
      %s139 = sadd.s32 %s138, 1
      %s140 = scalar_select %p137, %s138, %s139
      %p143 = pneg %p137
      %p144 = scmp.eq.s32.totalorder %s24, 1
      %p145 = por %p143, %p144
      %p146 = scmp.ne.s32.totalorder %s138, %s141
      %p147 = scmp.eq.s32.totalorder %s24, 0
      %p148 = por %p146, %p147
      %p149 = scmp.ne.s32.totalorder %s138, %s141
      %p150 = scmp.eq.s32.totalorder %s29, 1
      %p151 = por %p149, %p150
      %p152 = scmp.ne.s32.totalorder %s141, %s142
      %p153 = scmp.eq.s32.totalorder %s29, 0
      %p154 = por %p152, %p153
      %p155 = scmp.ne.s32.totalorder %s141, %s142
      %p156 = scmp.eq.s32.totalorder %s30, 1
      %p157 = por %p155, %p156
      %p159 = scmp.ne.s32.totalorder %s142, %s158
      %p160 = scmp.eq.s32.totalorder %s30, 0
      %p161 = por %p159, %p160
      %s163 = sadd.s32 %s162, 1
      %p166 = scmp.eq.s32.totalorder %s24, 1
      %p167 = scmp.ne.s32.totalorder %s162, %s164
      %p168 = scmp.eq.s32.totalorder %s24, 0
      %p169 = por %p167, %p168
      %p170 = scmp.ne.s32.totalorder %s162, %s164
      %p171 = scmp.eq.s32.totalorder %s29, 1
      %p172 = por %p170, %p171
      %p173 = scmp.ne.s32.totalorder %s164, %s165
      %p174 = scmp.eq.s32.totalorder %s29, 0
      %p175 = por %p173, %p174
      %p176 = scmp.ne.s32.totalorder %s164, %s165
      %p177 = scmp.eq.s32.totalorder %s30, 1
      %p178 = por %p176, %p177
      %p180 = scmp.ne.s32.totalorder %s165, %s179
      %p181 = scmp.eq.s32.totalorder %s30, 0
      %p182 = por %p180, %p181
      %s184 = sadd.s32 %s183, 1
      %p187 = scmp.eq.s32.totalorder %s24, 1
      %p188 = scmp.ne.s32.totalorder %s183, %s185
      %p189 = scmp.eq.s32.totalorder %s24, 0
      %p190 = por %p188, %p189
      %p191 = scmp.ne.s32.totalorder %s183, %s185
      %p192 = scmp.eq.s32.totalorder %s29, 1
      %p193 = por %p191, %p192
      %p194 = scmp.ne.s32.totalorder %s185, %s186
      %p195 = scmp.eq.s32.totalorder %s29, 0
      %p196 = por %p194, %p195
      %p197 = scmp.ne.s32.totalorder %s185, %s186
      %p198 = scmp.eq.s32.totalorder %s30, 1
      %p199 = por %p197, %p198
      %p201 = scmp.ne.s32.totalorder %s186, %s200
      %p202 = scmp.eq.s32.totalorder %s30, 0
      %p203 = por %p201, %p202
      %s205 = sadd.s32 %s204, 1
      %p208 = scmp.eq.s32.totalorder %s24, 1
      %p209 = scmp.ne.s32.totalorder %s204, %s206
      %p210 = scmp.eq.s32.totalorder %s24, 0
      %p211 = por %p209, %p210
      %p212 = scmp.ne.s32.totalorder %s204, %s206
      %p213 = scmp.eq.s32.totalorder %s29, 1
      %p214 = por %p212, %p213
      %p215 = scmp.ne.s32.totalorder %s206, %s207
      %p216 = scmp.eq.s32.totalorder %s29, 0
      %p217 = por %p215, %p216
      %p218 = scmp.ne.s32.totalorder %s206, %s207
      %p219 = scmp.eq.s32.totalorder %s30, 1
      %p220 = por %p218, %p219
      %p222 = scmp.ne.s32.totalorder %s207, %s221
      %p223 = scmp.eq.s32.totalorder %s30, 0
      %p224 = por %p222, %p223
      %s226 = sadd.s32 %s225, 1
      %p229 = scmp.eq.s32.totalorder %s24, 1
      %p230 = scmp.ne.s32.totalorder %s225, %s227
      %p231 = scmp.eq.s32.totalorder %s24, 0
      %p232 = por %p230, %p231
      %p233 = scmp.ne.s32.totalorder %s225, %s227
      %p234 = scmp.eq.s32.totalorder %s29, 1
      %p235 = por %p233, %p234
      %p236 = scmp.ne.s32.totalorder %s227, %s228
      %p237 = scmp.eq.s32.totalorder %s29, 0
      %p238 = por %p236, %p237
      %p239 = scmp.ne.s32.totalorder %s227, %s228
      %p240 = scmp.eq.s32.totalorder %s30, 1
      %p241 = por %p239, %p240
      %p243 = scmp.ne.s32.totalorder %s228, %s242
      %p244 = scmp.eq.s32.totalorder %s30, 0
      %p245 = por %p243, %p244
      %s247 = sadd.s32 %s246, 1
      %p250 = scmp.eq.s32.totalorder %s24, 1
      %p251 = scmp.ne.s32.totalorder %s246, %s248
      %p252 = scmp.eq.s32.totalorder %s24, 0
      %p253 = por %p251, %p252
      %p254 = scmp.ne.s32.totalorder %s246, %s248
      %p255 = scmp.eq.s32.totalorder %s29, 1
      %p256 = por %p254, %p255
      %p257 = scmp.ne.s32.totalorder %s248, %s249
      %p258 = scmp.eq.s32.totalorder %s29, 0
      %p259 = por %p257, %p258
      %p260 = scmp.ne.s32.totalorder %s248, %s249
      %p261 = scmp.eq.s32.totalorder %s30, 1
      %p262 = por %p260, %p261
      %p264 = scmp.ne.s32.totalorder %s249, %s263
      %p265 = scmp.eq.s32.totalorder %s30, 0
      %p266 = por %p264, %p265
      %s268 = sadd.s32 %s267, 1
      %p271 = scmp.eq.s32.totalorder %s24, 1
      %p272 = scmp.ne.s32.totalorder %s267, %s269
      %p273 = scmp.eq.s32.totalorder %s24, 0
      %p274 = por %p272, %p273
      %p275 = scmp.ne.s32.totalorder %s267, %s269
      %p276 = scmp.eq.s32.totalorder %s29, 1
      %p277 = por %p275, %p276
      %p278 = scmp.ne.s32.totalorder %s269, %s270
      %p279 = scmp.eq.s32.totalorder %s29, 0
      %p280 = por %p278, %p279
      %p281 = scmp.ne.s32.totalorder %s269, %s270
      %p282 = scmp.eq.s32.totalorder %s30, 1
      %p283 = por %p281, %p282
      %p285 = scmp.ne.s32.totalorder %s270, %s284
      %p286 = scmp.eq.s32.totalorder %s30, 0
      %p287 = por %p285, %p286
      %s289 = sadd.s32 %s288, 1
      %p292 = scmp.eq.s32.totalorder %s24, 1
      %p293 = scmp.ne.s32.totalorder %s288, %s290
      %p294 = scmp.eq.s32.totalorder %s24, 0
      %p295 = por %p293, %p294
      %p296 = scmp.ne.s32.totalorder %s288, %s290
      %p297 = scmp.eq.s32.totalorder %s29, 1
      %p298 = por %p296, %p297
      %p299 = scmp.ne.s32.totalorder %s290, %s291
      %p300 = scmp.eq.s32.totalorder %s29, 0
      %p301 = por %p299, %p300
      %p302 = scmp.ne.s32.totalorder %s290, %s291
      %p303 = scmp.eq.s32.totalorder %s30, 1
      %p304 = por %p302, %p303
      %p306 = scmp.ne.s32.totalorder %s291, %s305
      %p307 = scmp.eq.s32.totalorder %s30, 0
      %p308 = por %p306, %p307
      %s310 = sadd.s32 %s309, 1
      %p313 = scmp.eq.s32.totalorder %s24, 1
      %p314 = scmp.ne.s32.totalorder %s309, %s311
      %p315 = scmp.eq.s32.totalorder %s24, 0
      %p316 = por %p314, %p315
      %p317 = scmp.ne.s32.totalorder %s309, %s311
      %p318 = scmp.eq.s32.totalorder %s29, 1
      %p319 = por %p317, %p318
      %p320 = scmp.ne.s32.totalorder %s311, %s312
      %p321 = scmp.eq.s32.totalorder %s29, 0
      %p322 = por %p320, %p321
      %p323 = scmp.ne.s32.totalorder %s311, %s312
      %p324 = scmp.eq.s32.totalorder %s30, 1
      %p325 = por %p323, %p324
      %p327 = scmp.ne.s32.totalorder %s312, %s326
      %p328 = scmp.eq.s32.totalorder %s30, 0
      %p329 = por %p327, %p328
      %s331 = sadd.s32 %s330, 1
      %p334 = scmp.eq.s32.totalorder %s24, 1
      %p335 = scmp.ne.s32.totalorder %s330, %s332
      %p336 = scmp.eq.s32.totalorder %s24, 0
      %p337 = por %p335, %p336
      %p338 = scmp.ne.s32.totalorder %s330, %s332
      %p339 = scmp.eq.s32.totalorder %s29, 1
      %p340 = por %p338, %p339
      %p341 = scmp.ne.s32.totalorder %s332, %s333
      %p342 = scmp.eq.s32.totalorder %s29, 0
      %p343 = por %p341, %p342
      %p344 = scmp.ne.s32.totalorder %s332, %s333
      %p345 = scmp.eq.s32.totalorder %s30, 1
      %p346 = por %p344, %p345
      %p348 = scmp.ne.s32.totalorder %s333, %s347
      %p349 = scmp.eq.s32.totalorder %s30, 0
      %p350 = por %p348, %p349
      %s351 = ssub.s32 %s24, %s31
      %p352 = scmp.eq.s32.totalorder %s351, 0
      %s354 = sadd.s32 %s353, 1
      %s355 = scalar_select %p352, %s353, %s354
      %p358 = pneg %p352
      %p359 = scmp.eq.s32.totalorder %s24, 1
      %p360 = por %p358, %p359
      %p361 = scmp.ne.s32.totalorder %s353, %s356
      %p362 = scmp.eq.s32.totalorder %s24, 0
      %p363 = por %p361, %p362
      %p364 = scmp.ne.s32.totalorder %s353, %s356
      %p365 = scmp.eq.s32.totalorder %s29, 1
      %p366 = por %p364, %p365
      %p367 = scmp.ne.s32.totalorder %s356, %s357
      %p368 = scmp.eq.s32.totalorder %s29, 0
      %p369 = por %p367, %p368
      %p370 = scmp.ne.s32.totalorder %s356, %s357
      %p371 = scmp.eq.s32.totalorder %s30, 1
      %p372 = por %p370, %p371
      %p374 = scmp.ne.s32.totalorder %s357, %s373
      %p375 = scmp.eq.s32.totalorder %s30, 0
      %p376 = por %p374, %p375
      %p377 = scmp.le.s32.totalorder 1, %s24
      %p378 = scmp.lt.s32.totalorder %s24, 3
      %p379 = pnand %p377, %p378
      %p380 = pneg %p379
      // Predicated region
      $region9: #{tpu_custom_call.1} parent=5 // pred_check
        _
      $region10: #{tpu_custom_call.1} parent=5 // pred_check_branch
        %382 = sbr.rel (%p379) target = $region12
      $region11: #{tpu_custom_call.1} parent=5 // pred_region
        %s383 = ssub.s32 %s24, 1
        // Predicated region
        $region13: #{tpu_custom_call.1} parent=11 // pred_check
          %p384 = pneg %p175
        $region14: #{tpu_custom_call.1} parent=11 // pred_check_branch
          %386 = sbr.rel (%p384) target = $region16
        $region15: #{tpu_custom_call.1} parent=11 // pred_region
          _
        $region16: #{tpu_custom_call.1} parent=11 // pred_fallthru
          _
        // Predicated region
        $region17: #{tpu_custom_call.1} parent=11 // pred_check
          %p387 = pneg %p196
        $region18: #{tpu_custom_call.1} parent=11 // pred_check_branch
          %389 = sbr.rel (%p387) target = $region20
        $region19: #{tpu_custom_call.1} parent=11 // pred_region
          _
        $region20: #{tpu_custom_call.1} parent=11 // pred_fallthru
          _
        // Predicated region
        $region21: #{tpu_custom_call.1} parent=11 // pred_check
          %p390 = pneg %p217
        $region22: #{tpu_custom_call.1} parent=11 // pred_check_branch
          %392 = sbr.rel (%p390) target = $region24
        $region23: #{tpu_custom_call.1} parent=11 // pred_region
          _
        $region24: #{tpu_custom_call.1} parent=11 // pred_fallthru
          _
        // Predicated region
        $region25: #{tpu_custom_call.1} parent=11 // pred_check
          %p393 = pneg %p238
        $region26: #{tpu_custom_call.1} parent=11 // pred_check_branch
          %395 = sbr.rel (%p393) target = $region28
        $region27: #{tpu_custom_call.1} parent=11 // pred_region
          _
        $region28: #{tpu_custom_call.1} parent=11 // pred_fallthru
          _
        // Predicated region
        $region29: #{tpu_custom_call.1} parent=11 // pred_check
          %p396 = pneg %p259
        $region30: #{tpu_custom_call.1} parent=11 // pred_check_branch
          %398 = sbr.rel (%p396) target = $region32
        $region31: #{tpu_custom_call.1} parent=11 // pred_region
          _
        $region32: #{tpu_custom_call.1} parent=11 // pred_fallthru
          _
        // Predicated region
        $region33: #{tpu_custom_call.1} parent=11 // pred_check
          %p399 = pneg %p280
        $region34: #{tpu_custom_call.1} parent=11 // pred_check_branch
          %401 = sbr.rel (%p399) target = $region36
        $region35: #{tpu_custom_call.1} parent=11 // pred_region
          _
        $region36: #{tpu_custom_call.1} parent=11 // pred_fallthru
          _
        // Predicated region
        $region37: #{tpu_custom_call.1} parent=11 // pred_check
          %p402 = pneg %p301
        $region38: #{tpu_custom_call.1} parent=11 // pred_check_branch
          %404 = sbr.rel (%p402) target = $region40
        $region39: #{tpu_custom_call.1} parent=11 // pred_region
          %s406 = ssub.s32 2048, 2048
          %407 = vsyncadd [#allocation3], %s406
          %s408 = sshll.u32 [#allocation2], 4
          %s409 = int_to_ptr.vmem [resolvable:$true] %s408
          %414 = dma.hbm_to_vmem [thread:$0]  %s11, 2048, %s409, [#allocation3], 128, 128, 8
        $region40: #{tpu_custom_call.1} parent=11 // pred_fallthru
          _
        // Predicated region
        $region41: #{tpu_custom_call.1} parent=11 // pred_check
          %p415 = pneg %p322
        $region42: #{tpu_custom_call.1} parent=11 // pred_check_branch
          %417 = sbr.rel (%p415) target = $region44
        $region43: #{tpu_custom_call.1} parent=11 // pred_region
          _
        $region44: #{tpu_custom_call.1} parent=11 // pred_fallthru
          _
        // Predicated region
        $region45: #{tpu_custom_call.1} parent=11 // pred_check
          %p418 = pneg %p343
        $region46: #{tpu_custom_call.1} parent=11 // pred_check_branch
          %420 = sbr.rel (%p418) target = $region48
        $region47: #{tpu_custom_call.1} parent=11 // pred_region
          _
        $region48: #{tpu_custom_call.1} parent=11 // pred_fallthru
          _
      $region12: #{tpu_custom_call.1} parent=5 // pred_fallthru
        _
      %p421 = scmp.lt.s32.totalorder %s24, 2
      // Predicated region
      $region49: #{tpu_custom_call.1} parent=5 // pred_check
        %p422 = pneg %p421
      $region50: #{tpu_custom_call.1} parent=5 // pred_check_branch
        %424 = sbr.rel (%p422) target = $region52
      $region51: #{tpu_custom_call.1} parent=5 // pred_region
        // Predicated region
        $region53: #{tpu_custom_call.1} parent=51 // pred_check
          %p425 = pneg %p44
        $region54: #{tpu_custom_call.1} parent=51 // pred_check_branch
          %427 = sbr.rel (%p425) target = $region56
        $region55: #{tpu_custom_call.1} parent=51 // pred_region
          %p428 = scmp.lt.s32.totalorder %s24, 1
          %s429 = scalar_select %p428, %s24, 1
          %s430 = smul.addr %s429, 8
          %s431 = scalar_lea.vmem %s0, %s430
        $region56: #{tpu_custom_call.1} parent=51 // pred_fallthru
          _
        // Predicated region
        $region57: #{tpu_custom_call.1} parent=51 // pred_check
          %p432 = pneg %p70
        $region58: #{tpu_custom_call.1} parent=51 // pred_check_branch
          %434 = sbr.rel (%p432) target = $region60
        $region59: #{tpu_custom_call.1} parent=51 // pred_region
          %p435 = scmp.lt.s32.totalorder %s24, 1
          %s436 = scalar_select %p435, %s24, 1
          %s437 = smul.addr %s436, 8
          %s438 = scalar_lea.vmem %s1, %s437
        $region60: #{tpu_custom_call.1} parent=51 // pred_fallthru
          _
        // Predicated region
        $region61: #{tpu_custom_call.1} parent=51 // pred_check
          %p439 = pneg %p96
        $region62: #{tpu_custom_call.1} parent=51 // pred_check_branch
          %441 = sbr.rel (%p439) target = $region64
        $region63: #{tpu_custom_call.1} parent=51 // pred_region
          %p442 = scmp.lt.s32.totalorder %s24, 1
          %s443 = scalar_select %p442, %s24, 1
          %s444 = smul.addr %s443, 8
          %s445 = scalar_lea.vmem %s2, %s444
        $region64: #{tpu_custom_call.1} parent=51 // pred_fallthru
          _
        // Predicated region
        $region65: #{tpu_custom_call.1} parent=51 // pred_check
          %p446 = pneg %p122
        $region66: #{tpu_custom_call.1} parent=51 // pred_check_branch
          %448 = sbr.rel (%p446) target = $region68
        $region67: #{tpu_custom_call.1} parent=51 // pred_region
          %p449 = scmp.lt.s32.totalorder %s24, 1
          %s450 = scalar_select %p449, %s24, 1
          %s451 = smul.addr %s450, 8
          %s452 = scalar_lea.vmem %s3, %s451
        $region68: #{tpu_custom_call.1} parent=51 // pred_fallthru
          _
        // Predicated region
        $region69: #{tpu_custom_call.1} parent=51 // pred_check
          %p453 = pneg %p148
        $region70: #{tpu_custom_call.1} parent=51 // pred_check_branch
          %455 = sbr.rel (%p453) target = $region72
        $region71: #{tpu_custom_call.1} parent=51 // pred_region
          %p456 = scmp.lt.s32.totalorder %s24, 1
          %s457 = scalar_select %p456, %s24, 1
          %s458 = smul.addr %s457, 8
          %s459 = scalar_lea.vmem %s4, %s458
        $region72: #{tpu_custom_call.1} parent=51 // pred_fallthru
          _
      $region52: #{tpu_custom_call.1} parent=5 // pred_fallthru
        _
      %p460 = scmp.le.s32.totalorder 1, %s24
      %p461 = scmp.lt.s32.totalorder %s24, 3
      %p462 = pnand %p460, %p461
      %p463 = pneg %p462
      // Predicated region
      $region73: #{tpu_custom_call.1} parent=5 // pred_check
        _
      $region74: #{tpu_custom_call.1} parent=5 // pred_check_branch
        %465 = sbr.rel (%p462) target = $region76
      $region75: #{tpu_custom_call.1} parent=5 // pred_region
        %s466 = ssub.s32 %s24, 1
        // Predicated region
        $region77: #{tpu_custom_call.1} parent=75 // pred_check
          %p467 = pneg %p301
        $region78: #{tpu_custom_call.1} parent=75 // pred_check_branch
          %469 = sbr.rel (%p467) target = $region80
        $region79: #{tpu_custom_call.1} parent=75 // pred_region
          %470 = dma.done [#allocation3], 2048
        $region80: #{tpu_custom_call.1} parent=75 // pred_fallthru
          _
        %p471 = scmp.lt.s32.totalorder %s29, 1
        %s472 = scalar_select %p471, %s29, 1
        %s473 = smul.addr %s472, 8
        %s474 = scalar_lea.vmem %s0, %s473
        %p475 = pneg %p50
        %p476 = pneg %p47
        %p477 = scmp.lt.s32.totalorder %s29, 1
        %s478 = scalar_select %p477, %s29, 1
        %s479 = smul.addr %s478, 8
        %s480 = scalar_lea.vmem %s1, %s479
        %p481 = pneg %p76
        %p482 = pneg %p73
        %p483 = scmp.lt.s32.totalorder %s29, 1
        %s484 = scalar_select %p483, %s29, 1
        %s485 = smul.addr %s484, 8
        %s486 = scalar_lea.vmem %s2, %s485
        %p487 = pneg %p102
        %p488 = pneg %p99
        %p489 = scmp.lt.s32.totalorder %s29, 1
        %s490 = scalar_select %p489, %s29, 1
        %s491 = smul.addr %s490, 8
        %s492 = scalar_lea.vmem %s3, %s491
        %p493 = pneg %p128
        %p494 = pneg %p125
        %p495 = scmp.lt.s32.totalorder %s29, 1
        %s496 = scalar_select %p495, %s29, 1
        %s497 = smul.addr %s496, 8
        %s498 = scalar_lea.vmem %s4, %s497
        %p499 = pneg %p154
        %p500 = pneg %p151
        %p501 = pneg %p175
        %p502 = pneg %p172
        %p503 = pneg %p196
        %p504 = pneg %p193
        %p505 = pneg %p217
        %p506 = pneg %p214
        %p507 = pneg %p238
        %p508 = pneg %p235
        %p509 = pneg %p259
        %p510 = pneg %p256
        %p511 = pneg %p280
        %p512 = pneg %p277
        %p513 = pneg %p301
        %p514 = pneg %p298
        %p515 = pneg %p322
        %p516 = pneg %p319
        %p517 = pneg %p343
        %p518 = pneg %p340
        %p519 = pneg %p369
        %p520 = pneg %p366
        %s521 = sand.u32 %s356, 1
        %s522 = scalar_lea.sflag [#allocation4], %s521
        %s523 = sand.u32 %s356, 1
        %s524 = smul.addr %s523, 8
        %s525 = scalar_lea.vmem [#allocation5], %s524
        %p526 = scmp.lt.s32.totalorder %s29, 1
        %s527 = scalar_select %p526, %s29, 1
        %s528 = smul.addr %s527, 8
        %s529 = scalar_lea.vmem %s0, %s528
        %p530 = scmp.lt.s32.totalorder %s29, 1
        %s531 = scalar_select %p530, %s29, 1
        %s532 = smul.addr %s531, 8
        %s533 = scalar_lea.vmem %s1, %s532
        %p534 = scmp.lt.s32.totalorder %s29, 1
        %s535 = scalar_select %p534, %s29, 1
        %s536 = smul.addr %s535, 8
        %s537 = scalar_lea.vmem %s2, %s536
        %p538 = scmp.lt.s32.totalorder %s29, 1
        %s539 = scalar_select %p538, %s29, 1
        %s540 = smul.addr %s539, 8
        %s541 = scalar_lea.vmem %s3, %s540
        %p542 = scmp.lt.s32.totalorder %s29, 1
        %s543 = scalar_select %p542, %s29, 1
        %s544 = smul.addr %s543, 8
        %s545 = scalar_lea.vmem %s4, %s544
        %v546 = vld [vmem:[%s529] sm:$0xff]
        %v547 = vld [vmem:[%s5] sm:$0xff]
        %v548 = vld [vmem:[%s5 + $0x8] sm:$0xff]
        %v549 = vld [vmem:[%s533] sm:$0xff]
        %v550 = vld [vmem:[%s6] sm:$0x7]
        %vm551 = vcmask 23552
        %v553 = vsel %vm551, %v549, 0
        %vm555 = vcmask 1042432
        %v557 = vsel %vm555, %v550, 0
        %559 = vmatprep.subr.mxu0 0.0
        %560 = vmatpush1.msra.mxu0 0.0
        %561 = vmatprep.subr.mxu0 0.0
        %562 = vmatpush1.msra.mxu0 0.0
        %563 = vmatprep.subr.mxu0 0.0
        %564 = vmatpush1.msra.mxu0 0.0
        %565 = vmatprep.subr.mxu0 0.0
        %566 = vmatpush1.msra.mxu0 0.0
        %567 = vmatprep.subr.mxu0 0.0
        %568 = vmatpush1.msra.mxu0 0.0
        %569 = vmatprep.subr.mxu0 0.0
        %570 = vmatpush1.msra.mxu0 0.0
        %571 = vmatprep.subr.mxu0 0.0
        %572 = vmatpush1.msra.mxu0 0.0
        %573 = vmatprep.subr.mxu0 0.0
        %574 = vmatpush1.msra.mxu0 0.0
        %575 = vmatprep.subr.mxu0 0.0
        %576 = vmatpush1.msra.mxu0 0.0
        %577 = vmatprep.subr.mxu0 0.0
        %578 = vmatpush1.msra.mxu0 0.0
        %579 = vmatprep.subr.mxu0 0.0
        %580 = vmatpush1.msra.mxu0 0.0
        %581 = vmatprep.subr.mxu0 0.0
        %582 = vmatpush1.msra.mxu0 0.0
        %583 = vmatprep.subr.mxu0 0.0
        %584 = vmatpush1.msra.mxu0 0.0
        %585 = vmatprep.subr.mxu0 0.0
        %586 = vmatpush1.msra.mxu0 0.0
        %587 = vmatprep.subr.mxu0 0.0
        %588 = vmatpush1.msra.mxu0 0.0
        %589 = vmatprep.subr.mxu0 0.0
        %590 = vmatpush1.msra.mxu0 %v557
        %591 = vmatprep.subr.mxu0 0.0
        %592 = vmatpush2.msra.mxu0 0.0
        %593 = vmatprep.subr.mxu0 0.0
        %594 = vmatpush2.msra.mxu0 0.0
        %595 = vmatprep.subr.mxu0 0.0
        %596 = vmatpush2.msra.mxu0 0.0
        %597 = vmatprep.subr.mxu0 0.0
        %598 = vmatpush2.msra.mxu0 0.0
        %599 = vmatprep.subr.mxu0 0.0
        %600 = vmatpush2.msra.mxu0 0.0
        %601 = vmatprep.subr.mxu0 0.0
        %602 = vmatpush2.msra.mxu0 0.0
        %603 = vmatprep.subr.mxu0 0.0
        %604 = vmatpush2.msra.mxu0 0.0
        %605 = vmatprep.subr.mxu0 0.0
        %606 = vmatpush2.msra.mxu0 0.0
        %607 = vmatprep.subr.mxu0 0.0
        %608 = vmatpush2.msra.mxu0 0.0
        %609 = vmatprep.subr.mxu0 0.0
        %610 = vmatpush2.msra.mxu0 0.0
        %611 = vmatprep.subr.mxu0 0.0
        %612 = vmatpush2.msra.mxu0 0.0
        %613 = vmatprep.subr.mxu0 0.0
        %614 = vmatpush2.msra.mxu0 0.0
        %615 = vmatprep.subr.mxu0 0.0
        %616 = vmatpush2.msra.mxu0 0.0
        %617 = vmatprep.subr.mxu0 0.0
        %618 = vmatpush2.msra.mxu0 0.0
        %619 = vmatprep.subr.mxu0 0.0
        %620 = vmatpush2.msra.mxu0 0.0
        %621 = vmatprep.subr.mxu0 0.0
        %622 = vmatpush2.msra.mxu0 0.0
        %623 = vmatprep.mubr.f32.mxu0 0.0
        %624 = vmatmul.mubr.f32.gmra.mxu0 %v553
        %v625 = vpop.f32.mrf.mxu0
        %v626 = vadd.f32 0.0, %v625
        %v627 = vpop.f32.mrf.mxu0
        %628 = vdwg.mxu0
        %vm629 = vcmask 130048
        %v631 = vsel %vm629, %v546, 0
        %633 = vmatprep.subr.mxu0 0.0
        %634 = vmatpush1.msra.mxu0 0.0
        %635 = vmatprep.subr.mxu0 0.0
        %636 = vmatpush1.msra.mxu0 0.0
        %637 = vmatprep.subr.mxu0 0.0
        %638 = vmatpush1.msra.mxu0 0.0
        %639 = vmatprep.subr.mxu0 0.0
        %640 = vmatpush1.msra.mxu0 0.0
        %641 = vmatprep.subr.mxu0 0.0
        %642 = vmatpush1.msra.mxu0 0.0
        %643 = vmatprep.subr.mxu0 0.0
        %644 = vmatpush1.msra.mxu0 0.0
        %645 = vmatprep.subr.mxu0 0.0
        %646 = vmatpush1.msra.mxu0 0.0
        %647 = vmatprep.subr.mxu0 0.0
        %648 = vmatpush1.msra.mxu0 0.0
        %649 = vmatprep.subr.mxu0 0.0
        %650 = vmatpush1.msra.mxu0 0.0
        %651 = vmatprep.subr.mxu0 0.0
        %652 = vmatpush1.msra.mxu0 0.0
        %653 = vmatprep.subr.mxu0 0.0
        %654 = vmatpush1.msra.mxu0 0.0
        %655 = vmatprep.subr.mxu0 0.0
        %656 = vmatpush1.msra.mxu0 0.0
        %657 = vmatprep.subr.mxu0 0.0
        %658 = vmatpush1.msra.mxu0 0.0
        %659 = vmatprep.subr.mxu0 0.0
        %660 = vmatpush1.msra.mxu0 0.0
        %661 = vmatprep.subr.mxu0 0.0
        %662 = vmatpush1.msra.mxu0 %v548
        %663 = vmatprep.subr.mxu0 0.0
        %664 = vmatpush1.msra.mxu0 %v547
        %665 = vmatprep.subr.mxu0 0.0
        %666 = vmatpush2.msra.mxu0 0.0
        %667 = vmatprep.subr.mxu0 0.0
        %668 = vmatpush2.msra.mxu0 0.0
        %669 = vmatprep.subr.mxu0 0.0
        %670 = vmatpush2.msra.mxu0 0.0
        %671 = vmatprep.subr.mxu0 0.0
        %672 = vmatpush2.msra.mxu0 0.0
        %673 = vmatprep.subr.mxu0 0.0
        %674 = vmatpush2.msra.mxu0 0.0
        %675 = vmatprep.subr.mxu0 0.0
        %676 = vmatpush2.msra.mxu0 0.0
        %677 = vmatprep.subr.mxu0 0.0
        %678 = vmatpush2.msra.mxu0 0.0
        %679 = vmatprep.subr.mxu0 0.0
        %680 = vmatpush2.msra.mxu0 0.0
        %681 = vmatprep.subr.mxu0 0.0
        %682 = vmatpush2.msra.mxu0 0.0
        %683 = vmatprep.subr.mxu0 0.0
        %684 = vmatpush2.msra.mxu0 0.0
        %685 = vmatprep.subr.mxu0 0.0
        %686 = vmatpush2.msra.mxu0 0.0
        %687 = vmatprep.subr.mxu0 0.0
        %688 = vmatpush2.msra.mxu0 0.0
        %689 = vmatprep.subr.mxu0 0.0
        %690 = vmatpush2.msra.mxu0 0.0
        %691 = vmatprep.subr.mxu0 0.0
        %692 = vmatpush2.msra.mxu0 0.0
        %693 = vmatprep.subr.mxu0 0.0
        %694 = vmatpush2.msra.mxu0 0.0
        %695 = vmatprep.subr.mxu0 0.0
        %696 = vmatpush2.msra.mxu0 0.0
        %697 = vmatprep.mubr.f32.mxu0 0.0
        %698 = vmatmul.mubr.f32.gmra.mxu0 %v631
        %v699 = vpop.f32.mrf.mxu0
        %v700 = vadd.f32 %v626, %v699
        %v701 = vpop.f32.mrf.mxu0
        %702 = vdwg.mxu0
        %v703 = vld [vmem:[%s537] sm:$0xff]
        %v704 = vld [vmem:[%s7] sm:$0xff]
        %vm705 = vcmask 64512
        %v707 = vsel %vm705, %v703, 0
        %709 = vmatprep.subr.mxu0 0.0
        %710 = vmatpush1.msra.mxu0 0.0
        %711 = vmatprep.subr.mxu0 0.0
        %712 = vmatpush1.msra.mxu0 0.0
        %713 = vmatprep.subr.mxu0 0.0
        %714 = vmatpush1.msra.mxu0 0.0
        %715 = vmatprep.subr.mxu0 0.0
        %716 = vmatpush1.msra.mxu0 0.0
        %717 = vmatprep.subr.mxu0 0.0
        %718 = vmatpush1.msra.mxu0 0.0
        %719 = vmatprep.subr.mxu0 0.0
        %720 = vmatpush1.msra.mxu0 0.0
        %721 = vmatprep.subr.mxu0 0.0
        %722 = vmatpush1.msra.mxu0 0.0
        %723 = vmatprep.subr.mxu0 0.0
        %724 = vmatpush1.msra.mxu0 0.0
        %725 = vmatprep.subr.mxu0 0.0
        %726 = vmatpush1.msra.mxu0 0.0
        %727 = vmatprep.subr.mxu0 0.0
        %728 = vmatpush1.msra.mxu0 0.0
        %729 = vmatprep.subr.mxu0 0.0
        %730 = vmatpush1.msra.mxu0 0.0
        %731 = vmatprep.subr.mxu0 0.0
        %732 = vmatpush1.msra.mxu0 0.0
        %733 = vmatprep.subr.mxu0 0.0
        %734 = vmatpush1.msra.mxu0 0.0
        %735 = vmatprep.subr.mxu0 0.0
        %736 = vmatpush1.msra.mxu0 0.0
        %737 = vmatprep.subr.mxu0 0.0
        %738 = vmatpush1.msra.mxu0 0.0
        %739 = vmatprep.subr.mxu0 0.0
        %740 = vmatpush1.msra.mxu0 %v704
        %741 = vmatprep.subr.mxu0 0.0
        %742 = vmatpush2.msra.mxu0 0.0
        %743 = vmatprep.subr.mxu0 0.0
        %744 = vmatpush2.msra.mxu0 0.0
        %745 = vmatprep.subr.mxu0 0.0
        %746 = vmatpush2.msra.mxu0 0.0
        %747 = vmatprep.subr.mxu0 0.0
        %748 = vmatpush2.msra.mxu0 0.0
        %749 = vmatprep.subr.mxu0 0.0
        %750 = vmatpush2.msra.mxu0 0.0
        %751 = vmatprep.subr.mxu0 0.0
        %752 = vmatpush2.msra.mxu0 0.0
        %753 = vmatprep.subr.mxu0 0.0
        %754 = vmatpush2.msra.mxu0 0.0
        %755 = vmatprep.subr.mxu0 0.0
        %756 = vmatpush2.msra.mxu0 0.0
        %757 = vmatprep.subr.mxu0 0.0
        %758 = vmatpush2.msra.mxu0 0.0
        %759 = vmatprep.subr.mxu0 0.0
        %760 = vmatpush2.msra.mxu0 0.0
        %761 = vmatprep.subr.mxu0 0.0
        %762 = vmatpush2.msra.mxu0 0.0
        %763 = vmatprep.subr.mxu0 0.0
        %764 = vmatpush2.msra.mxu0 0.0
        %765 = vmatprep.subr.mxu0 0.0
        %766 = vmatpush2.msra.mxu0 0.0
        %767 = vmatprep.subr.mxu0 0.0
        %768 = vmatpush2.msra.mxu0 0.0
        %769 = vmatprep.subr.mxu0 0.0
        %770 = vmatpush2.msra.mxu0 0.0
        %771 = vmatprep.subr.mxu0 0.0
        %772 = vmatpush2.msra.mxu0 0.0
        %773 = vmatprep.mubr.f32.mxu0 0.0
        %774 = vmatmul.mubr.f32.gmra.mxu0 %v707
        %v775 = vpop.f32.mrf.mxu0
        %v776 = vadd.f32 0.0, %v775
        %v777 = vpop.f32.mrf.mxu0
        %778 = vdwg.mxu0
        %v779 = vadd.f32 %v700, %v776
        %v780 = vld [vmem:[%s8] sm:$0x1]
        %v782 = vlaneseq
        %v783 = vshrl.u32 %v782, 7
        %v784 = vsub.s32 0, %v783
        %v785 = vrot.slane %v780, %v784
        %v787 = vadd.f32 %v779, %v785
        %788 = vadd.xlane.f32.xlu0 %v787
        %v789 = vpop.xlane.xlu0 %788
        %v790 = vrcp.pop 128.0
        %v791 = vmul.f32 %v789, %v790
        %v792 = vmul.f32 %v787, %v787
        %793 = vadd.xlane.f32.xlu0 %v792
        %v794 = vpop.xlane.xlu0 %793
        %v795 = vmul.f32 %v794, %v790
        %v796 = vmul.f32 %v791, %v791
        %v797 = vsub.f32 %v795, %v796
        %v798 = vsub.f32 %v787, %v791
        %v799 = vadd.f32 %v797, 1e-05
        %v800 = vrsqrt.pop %v799
        %v801 = vmul.f32 %v798, %v800
        %v802 = vld [vmem:[%s9] sm:$0x1]
        %v804 = vlaneseq
        %v805 = vshrl.u32 %v804, 7
        %v806 = vsub.s32 0, %v805
        %v807 = vrot.slane %v802, %v806
        %v809 = vmul.f32 %v801, %v807
        %v810 = vld [vmem:[%s10] sm:$0x1]
        %v812 = vlaneseq
        %v813 = vshrl.u32 %v812, 7
        %v814 = vsub.s32 0, %v813
        %v815 = vrot.slane %v810, %v814
        %v817 = vadd.f32 %v809, %v815
        %v818 = vmax.f32 %v817, 0.0
        %v819 = vld [vmem:[#allocation2] sm:$0xff]
        %v820 = vld [vmem:[#allocation2 + $0x8] sm:$0xff]
        %v821 = vld [vmem:[#allocation2 + $0x10] sm:$0xff]
        %v822 = vld [vmem:[#allocation2 + $0x18] sm:$0xff]
        %v823 = vld [vmem:[#allocation2 + $0x20] sm:$0xff]
        %v824 = vld [vmem:[#allocation2 + $0x28] sm:$0xff]
        %v825 = vld [vmem:[#allocation2 + $0x30] sm:$0xff]
        %v826 = vld [vmem:[#allocation2 + $0x38] sm:$0xff]
        %v827 = vld [vmem:[#allocation2 + $0x40] sm:$0xff]
        %v828 = vld [vmem:[#allocation2 + $0x48] sm:$0xff]
        %v829 = vld [vmem:[#allocation2 + $0x50] sm:$0xff]
        %v830 = vld [vmem:[#allocation2 + $0x58] sm:$0xff]
        %v831 = vld [vmem:[#allocation2 + $0x60] sm:$0xff]
        %v832 = vld [vmem:[#allocation2 + $0x68] sm:$0xff]
        %v833 = vld [vmem:[#allocation2 + $0x70] sm:$0xff]
        %v834 = vld [vmem:[#allocation2 + $0x78] sm:$0xff]
        %v835 = vld [vmem:[%s12] sm:$0x1]
        %v837 = vlaneseq
        %v838 = vshrl.u32 %v837, 7
        %v839 = vsub.s32 0, %v838
        %v840 = vrot.slane %v835, %v839
        %842 = vmatprep.subr.mxu0 0.0
        %843 = vmatpush1.msra.mxu0 %v834
        %844 = vmatprep.subr.mxu0 0.0
        %845 = vmatpush1.msra.mxu0 %v833
        %846 = vmatprep.subr.mxu0 0.0
        %847 = vmatpush1.msra.mxu0 %v832
        %848 = vmatprep.subr.mxu0 0.0
        %849 = vmatpush1.msra.mxu0 %v831
        %850 = vmatprep.subr.mxu0 0.0
        %851 = vmatpush1.msra.mxu0 %v830
        %852 = vmatprep.subr.mxu0 0.0
        %853 = vmatpush1.msra.mxu0 %v829
        %854 = vmatprep.subr.mxu0 0.0
        %855 = vmatpush1.msra.mxu0 %v828
        %856 = vmatprep.subr.mxu0 0.0
        %857 = vmatpush1.msra.mxu0 %v827
        %858 = vmatprep.subr.mxu0 0.0
        %859 = vmatpush1.msra.mxu0 %v826
        %860 = vmatprep.subr.mxu0 0.0
        %861 = vmatpush1.msra.mxu0 %v825
        %862 = vmatprep.subr.mxu0 0.0
        %863 = vmatpush1.msra.mxu0 %v824
        %864 = vmatprep.subr.mxu0 0.0
        %865 = vmatpush1.msra.mxu0 %v823
        %866 = vmatprep.subr.mxu0 0.0
        %867 = vmatpush1.msra.mxu0 %v822
        %868 = vmatprep.subr.mxu0 0.0
        %869 = vmatpush1.msra.mxu0 %v821
        %870 = vmatprep.subr.mxu0 0.0
        %871 = vmatpush1.msra.mxu0 %v820
        %872 = vmatprep.subr.mxu0 0.0
        %873 = vmatpush1.msra.mxu0 %v819
        %874 = vmatprep.subr.mxu0 0.0
        %875 = vmatpush2.msra.mxu0 0.0
        %876 = vmatprep.subr.mxu0 0.0
        %877 = vmatpush2.msra.mxu0 0.0
        %878 = vmatprep.subr.mxu0 0.0
        %879 = vmatpush2.msra.mxu0 0.0
        %880 = vmatprep.subr.mxu0 0.0
        %881 = vmatpush2.msra.mxu0 0.0
        %882 = vmatprep.subr.mxu0 0.0
        %883 = vmatpush2.msra.mxu0 0.0
        %884 = vmatprep.subr.mxu0 0.0
        %885 = vmatpush2.msra.mxu0 0.0
        %886 = vmatprep.subr.mxu0 0.0
        %887 = vmatpush2.msra.mxu0 0.0
        %888 = vmatprep.subr.mxu0 0.0
        %889 = vmatpush2.msra.mxu0 0.0
        %890 = vmatprep.subr.mxu0 0.0
        %891 = vmatpush2.msra.mxu0 0.0
        %892 = vmatprep.subr.mxu0 0.0
        %893 = vmatpush2.msra.mxu0 0.0
        %894 = vmatprep.subr.mxu0 0.0
        %895 = vmatpush2.msra.mxu0 0.0
        %896 = vmatprep.subr.mxu0 0.0
        %897 = vmatpush2.msra.mxu0 0.0
        %898 = vmatprep.subr.mxu0 0.0
        %899 = vmatpush2.msra.mxu0 0.0
        %900 = vmatprep.subr.mxu0 0.0
        %901 = vmatpush2.msra.mxu0 0.0
        %902 = vmatprep.subr.mxu0 0.0
        %903 = vmatpush2.msra.mxu0 0.0
        %904 = vmatprep.subr.mxu0 0.0
        %905 = vmatpush2.msra.mxu0 0.0
        %906 = vmatprep.mubr.f32.mxu0 0.0
        %907 = vmatmul.mubr.f32.gmra.mxu0 %v818
        %v908 = vpop.f32.mrf.mxu0
        %v909 = vadd.f32 %v840, %v908
        %v910 = vpop.f32.mrf.mxu0
        %911 = vdwg.mxu0
        %v912 = vld [vmem:[%s545] sm:$0xff]
        %v913 = vlaneseq
        %v914 = vand.u32 %v913, 127
        %915 = vset.pattern.permute.xlu0 0
        %916 = vperm.xlu0 %915, %v912
        %v917 = vpop.permute.xlu0 %916
        %vm918 = vcmp.eq.s32.totalorder %v917, %v914
        %v919 = vsel %vm918, 1, 0
        %v920 = vcvt.s32.f32 %v919
        %v921 = vld [vmem:[%s13] sm:$0xff]
        %v923 = vsel %vm705, %v920, 0
        %925 = vmatprep.subr.mxu0 0.0
        %926 = vmatpush1.msra.mxu0 0.0
        %927 = vmatprep.subr.mxu0 0.0
        %928 = vmatpush1.msra.mxu0 0.0
        %929 = vmatprep.subr.mxu0 0.0
        %930 = vmatpush1.msra.mxu0 0.0
        %931 = vmatprep.subr.mxu0 0.0
        %932 = vmatpush1.msra.mxu0 0.0
        %933 = vmatprep.subr.mxu0 0.0
        %934 = vmatpush1.msra.mxu0 0.0
        %935 = vmatprep.subr.mxu0 0.0
        %936 = vmatpush1.msra.mxu0 0.0
        %937 = vmatprep.subr.mxu0 0.0
        %938 = vmatpush1.msra.mxu0 0.0
        %939 = vmatprep.subr.mxu0 0.0
        %940 = vmatpush1.msra.mxu0 0.0
        %941 = vmatprep.subr.mxu0 0.0
        %942 = vmatpush1.msra.mxu0 0.0
        %943 = vmatprep.subr.mxu0 0.0
        %944 = vmatpush1.msra.mxu0 0.0
        %945 = vmatprep.subr.mxu0 0.0
        %946 = vmatpush1.msra.mxu0 0.0
        %947 = vmatprep.subr.mxu0 0.0
        %948 = vmatpush1.msra.mxu0 0.0
        %949 = vmatprep.subr.mxu0 0.0
        %950 = vmatpush1.msra.mxu0 0.0
        %951 = vmatprep.subr.mxu0 0.0
        %952 = vmatpush1.msra.mxu0 0.0
        %953 = vmatprep.subr.mxu0 0.0
        %954 = vmatpush1.msra.mxu0 0.0
        %955 = vmatprep.subr.mxu0 0.0
        %956 = vmatpush1.msra.mxu0 %v921
        %957 = vmatprep.subr.mxu0 0.0
        %958 = vmatpush2.msra.mxu0 0.0
        %959 = vmatprep.subr.mxu0 0.0
        %960 = vmatpush2.msra.mxu0 0.0
        %961 = vmatprep.subr.mxu0 0.0
        %962 = vmatpush2.msra.mxu0 0.0
        %963 = vmatprep.subr.mxu0 0.0
        %964 = vmatpush2.msra.mxu0 0.0
        %965 = vmatprep.subr.mxu0 0.0
        %966 = vmatpush2.msra.mxu0 0.0
        %967 = vmatprep.subr.mxu0 0.0
        %968 = vmatpush2.msra.mxu0 0.0
        %969 = vmatprep.subr.mxu0 0.0
        %970 = vmatpush2.msra.mxu0 0.0
        %971 = vmatprep.subr.mxu0 0.0
        %972 = vmatpush2.msra.mxu0 0.0
        %973 = vmatprep.subr.mxu0 0.0
        %974 = vmatpush2.msra.mxu0 0.0
        %975 = vmatprep.subr.mxu0 0.0
        %976 = vmatpush2.msra.mxu0 0.0
        %977 = vmatprep.subr.mxu0 0.0
        %978 = vmatpush2.msra.mxu0 0.0
        %979 = vmatprep.subr.mxu0 0.0
        %980 = vmatpush2.msra.mxu0 0.0
        %981 = vmatprep.subr.mxu0 0.0
        %982 = vmatpush2.msra.mxu0 0.0
        %983 = vmatprep.subr.mxu0 0.0
        %984 = vmatpush2.msra.mxu0 0.0
        %985 = vmatprep.subr.mxu0 0.0
        %986 = vmatpush2.msra.mxu0 0.0
        %987 = vmatprep.subr.mxu0 0.0
        %988 = vmatpush2.msra.mxu0 0.0
        %989 = vmatprep.mubr.f32.mxu0 0.0
        %990 = vmatmul.mubr.f32.gmra.mxu0 %v923
        %v991 = vpop.f32.mrf.mxu0
        %v992 = vadd.f32 0.0, %v991
        %v993 = vpop.f32.mrf.mxu0
        %994 = vdwg.mxu0
        %v995 = vld [vmem:[%s541] sm:$0xff]
        %997 = vset.pattern.permute.xlu0 0
        %998 = vperm.xlu0 %997, %v995
        %v999 = vpop.permute.xlu0 %998
        %v1001 = vmul.f32 %v909, %v999
        %v1002 = vadd.f32 %v1001, %v992
        %1003 = vst [vmem:[%s525] sm:$0xff] %v1002
        %s1004 = sand.u32 %s356, 1
        %s1005 = scalar_lea.sflag [#allocation4], %s1004
        %s1006 = sand.u32 %s356, 1
        %s1007 = smul.addr %s1006, 8
        %s1008 = scalar_lea.vmem [#allocation5], %s1007
        // Predicated region
        $region81: #{tpu_custom_call.1} parent=75 // pred_check
          %p1009 = pneg %p366
        $region82: #{tpu_custom_call.1} parent=75 // pred_check_branch
          %1011 = sbr.rel (%p1009) target = $region84
        $region83: #{tpu_custom_call.1} parent=75 // pred_region
          %s1013 = ssub.s32 128, 128
          %1014 = vsyncadd %s1005, %s1013
          %s1015 = smul.addr %s29, 128
          %s1016 = scalar_lea.hbm %s14, %s1015
          %s1018 = sshll.u32 %s1008, 4
          %s1019 = int_to_ptr.vmem [resolvable:$true] %s1018
          %1021 = dma.vmem_to_hbm [thread:$0]  %s1019, 128, %s1016, %s1005
        $region84: #{tpu_custom_call.1} parent=75 // pred_fallthru
          _
      $region76: #{tpu_custom_call.1} parent=5 // pred_fallthru
        _
      %p1022 = scmp.le.s32.totalorder 2, %s24
      // Predicated region
      $region85: #{tpu_custom_call.1} parent=5 // pred_check
        %p1023 = pneg %p1022
      $region86: #{tpu_custom_call.1} parent=5 // pred_check_branch
        %1025 = sbr.rel (%p1023) target = $region88
      $region87: #{tpu_custom_call.1} parent=5 // pred_region
        %s1026 = ssub.s32 %s24, 2
        // Predicated region
        $region89: #{tpu_custom_call.1} parent=87 // pred_check
          %p1027 = pneg %p372
        $region90: #{tpu_custom_call.1} parent=87 // pred_check_branch
          %1029 = sbr.rel (%p1027) target = $region92
        $region91: #{tpu_custom_call.1} parent=87 // pred_region
          %s1030 = sand.u32 %s357, 1
          %s1031 = scalar_lea.sflag [#allocation4], %s1030
          %s1032 = sand.u32 %s357, 1
          %s1033 = smul.addr %s1032, 8
          %s1034 = scalar_lea.vmem [#allocation5], %s1033
          %1035 = dma.done %s1031, 128
        $region92: #{tpu_custom_call.1} parent=87 // pred_fallthru
          _
      $region88: #{tpu_custom_call.1} parent=5 // pred_fallthru
        _
    $region6: #{tpu_custom_call.1} parent=1 // loop_footer
      %s28 = sadd.s32 1, %s24
    $region7: #{tpu_custom_call.1} parent=1 // loop_footer_branch
      %23 = sbr.rel target = $region3
    $region8: #{tpu_custom_call.1} parent=1 // loop_exit
      _
    %1036 = vsyncpa [#allocation3], 1
    %s1037 = scalar_lea.sflag [#allocation3], 1
    %1038 = vsyncpa %s1037, 1
    %1039 = vsyncpa [#allocation4], 1
    %s1040 = scalar_lea.sflag [#allocation4], 1
    %1041 = vsyncpa %s1040, 1

</llo_original>
